<compile_context>
chip_gen: v5e
topology: v5e:2x2
jax: 0.10.0
libtpu: 0.0.40
codegen_flags: <defaults>
</compile_context>

<pallas_src>
import functools
import math

import jax
import jax.numpy as jnp
from jax.experimental import pallas as pl
from jax.experimental.pallas import tpu as pltpu

NEG_SLOPE = 0.2          # LeakyReLU slope assumed for LatentGeneratorBlock
LANE = 128
SUBLANE = 8
_MAX_BATCH_TILE = 1024   # rows; overhead-amortising cap for narrow models
_ACT_VMEM_BUDGET = 8 << 20   # bytes reserved for streamed tiles + temporaries


def _round_up(n, m):
    return ((n + m - 1) // m) * m


def _pad2d(a, rows, cols):
    r, c = a.shape
    if r == rows and c == cols:
        return a
    return jnp.pad(a, ((0, rows - r), (0, cols - c)))


# --------------------------------------------------------------------------
# Kernel: fused 6-layer MLP (5x Linear+LeakyReLU, then Linear).
# --------------------------------------------------------------------------
def _latent_generator_kernel(x_ref,
                             w0, b0, w1, b1, w2, b2, w3, b3, w4, b4, w5, b5,
                             out_ref):
    # Load every weight/bias exactly once (loop-invariant for the scheduler).
    ws = [w0[...], w1[...], w2[...], w3[...], w4[...], w5[...]]
    bs = [b0[...], b1[...], b2[...], b3[...], b4[...], b5[...]]

    h = x_ref[...]                                         # bf16 activations
    for layer in range(5):
        y = jnp.dot(h, ws[layer], preferred_element_type=jnp.float32)
        y = y + bs[layer]                                  # f32 bias add (VPU)
        y = jnp.maximum(y, NEG_SLOPE * y)                  # LeakyReLU: one vmax
        h = y.astype(jnp.bfloat16)

    out = jnp.dot(h, ws[5], preferred_element_type=jnp.float32) + bs[5]
    out_ref[...] = out.astype(out_ref.dtype)


# --------------------------------------------------------------------------
# One-time static capability check for single-buffered (constant) weights.
# --------------------------------------------------------------------------
@functools.lru_cache(maxsize=None)
def _supports_single_buffered_weights():
    if not hasattr(pl, "Buffered"):
        return False
    try:
        def _k(x_ref, w_ref, o_ref):
            o_ref[...] = x_ref[...] + w_ref[...]

        probe = pl.pallas_call(
            _k,
            out_shape=jax.ShapeDtypeStruct((SUBLANE, LANE), jnp.float32),
            grid=(1,),
            in_specs=[
                pl.BlockSpec((SUBLANE, LANE), lambda i: (0, 0)),
                pl.BlockSpec((SUBLANE, LANE), lambda i: (0, 0),
                             pipeline_mode=pl.Buffered(1)),
            ],
            out_specs=pl.BlockSpec((SUBLANE, LANE), lambda i: (0, 0)),
        )
        z = jnp.zeros((SUBLANE, LANE), jnp.float32)
        jax.jit(probe).lower(z, z).compile()
        return True
    except Exception:
        return False


# --------------------------------------------------------------------------
# One-time weight preparation (padding + bf16 cast), hoisted out of the call.
# --------------------------------------------------------------------------
def prepare_latent_generator(params):
    """Pad/cast the 6 (W, b) pairs once.

    W is stored (in_features, out_features) (already transposed vs. nn.Linear)
    and padded to 128-lane multiples; zero padding is exact through every
    layer (padded lanes stay zero).  Returns (ws_p, bs_p, latent_size).
    """
    feat = [params[0][0].shape[0]] + [w.shape[1] for (w, _) in params]
    feat_p = [_round_up(d, LANE) for d in feat]
    ws_p, bs_p = [], []
    for li, (w, b) in enumerate(params):
        ws_p.append(
            _pad2d(jnp.asarray(w, jnp.float32), feat_p[li], feat_p[li + 1])
            .astype(jnp.bfloat16))
        bs_p.append(
            _pad2d(jnp.asarray(b, jnp.float32).reshape(1, -1), 1,
                   feat_p[li + 1]))
    return tuple(ws_p), tuple(bs_p), feat[-1]


# --------------------------------------------------------------------------
# Jitted forward: pad input, run the fused kernel, slice the result.
# --------------------------------------------------------------------------
@functools.partial(jax.jit,
                   static_argnames=("latent_size", "single_buffer_weights"))
def _latent_generator_forward_impl(x, ws_p, bs_p, *, latent_size,
                                   single_buffer_weights):
    B, _ = x.shape
    feat_p = [ws_p[0].shape[0]] + [w.shape[1] for w in ws_p]

    # ---- batch tiling -------------------------------------------------------
    # Biggest tile that fits the activation VMEM budget (cap 1024 rows), but
    # >= 2 even grid steps once the padded batch reaches 16 rows so v7x can
    # shard the "parallel" batch axis across both TensorCores.
    per_row_bytes = ((feat_p[0] * 2 + feat_p[-1] * 4) * 2      # streamed, 2-buf
                     + max(feat_p) * 4 * 3)                    # f32 temporaries
    rows_budget = max(SUBLANE,
                      (_ACT_VMEM_BUDGET // per_row_bytes) // SUBLANE * SUBLANE)
    max_tile = min(_MAX_BATCH_TILE, rows_budget)

    B_pad8 = _round_up(B, SUBLANE)
    if B_pad8 < 2 * SUBLANE:
        steps = 1
        batch_tile = B_pad8
    else:
        steps = max(2, -(-B_pad8 // max_tile))
        if steps % 2:
            steps += 1                     # even step count -> balanced TCs
        batch_tile = _round_up(-(-B_pad8 // steps), SUBLANE)
    B_pad = batch_tile * steps
    grid = (steps,)

    # ---- pad input (exact zero padding) -------------------------------------
    x_p = _pad2d(x.astype(jnp.float32), B_pad, feat_p[0]).astype(jnp.bfloat16)

    # ---- VMEM budget / scoped limit -----------------------------------------
    wbuf = 1 if single_buffer_weights else 2
    weight_bytes = (sum(int(w.size) * 2 for w in ws_p)
                    + sum(int(b.size) * 4 for b in bs_p)) * wbuf
    stream_bytes = batch_tile * (feat_p[0] * 2 + feat_p[-1] * 4) * 2
    temp_bytes = batch_tile * max(feat_p) * 4 * 3
    needed = weight_bytes + stream_bytes + temp_bytes + (2 << 20)
    vmem_limit = int(min(max(needed, 32 << 20), 128 << 20))

    # ---- block specs ---------------------------------------------------------
    in_specs = [pl.BlockSpec((batch_tile, feat_p[0]), lambda i: (i, 0))]
    for w, b in zip(ws_p, bs_p):
        if single_buffer_weights:
            # Constant index_map -> one resident copy is enough; avoids the
            # default 2x double-buffer VMEM for every weight matrix.
            in_specs.append(pl.BlockSpec(w.shape, lambda i: (0, 0),
                                         pipeline_mode=pl.Buffered(1)))
            in_specs.append(pl.BlockSpec(b.shape, lambda i: (0, 0),
                                         pipeline_mode=pl.Buffered(1)))
        else:
            in_specs.append(pl.BlockSpec(w.shape, lambda i: (0, 0)))
            in_specs.append(pl.BlockSpec(b.shape, lambda i: (0, 0)))
    out_spec = pl.BlockSpec((batch_tile, feat_p[-1]), lambda i: (i, 0))

    # ---- advisory cost estimate ---------------------------------------------
    flops = 2 * B_pad * sum(feat_p[i] * feat_p[i + 1] for i in range(6))
    bytes_accessed = (int(x_p.size) * 2 + B_pad * feat_p[-1] * 4
                      + sum(int(w.size) * 2 for w in ws_p)
                      + sum(int(b.size) * 4 for b in bs_p))
    cost = pl.CostEstimate(flops=int(flops), transcendentals=0,
                           bytes_accessed=int(bytes_accessed))

    flat_args = [x_p]
    for w, b in zip(ws_p, bs_p):
        flat_args += [w, b]

    out_p = pl.pallas_call(
        _latent_generator_kernel,
        out_shape=jax.ShapeDtypeStruct((B_pad, feat_p[-1]), jnp.float32),
        grid_spec=pltpu.PrefetchScalarGridSpec(
            num_scalar_prefetch=0,
            grid=grid,
            in_specs=in_specs,
            out_specs=out_spec,
        ),
        compiler_params=pltpu.CompilerParams(
            dimension_semantics=("parallel",),
            vmem_limit_bytes=vmem_limit,
        ),
        cost_estimate=cost,
    )(*flat_args)

    return out_p[:B, :latent_size]


def latent_generator_forward(x, prepared):
    """LatentGenerator forward.  `prepared` comes from prepare_latent_generator."""
    ws_p, bs_p, latent_size = prepared
    return _latent_generator_forward_impl(
        x, ws_p, bs_p,
        latent_size=latent_size,
        single_buffer_weights=_supports_single_buffered_weights())


# --------------------------------------------------------------------------
# Parameter init + pure-JAX reference.
# --------------------------------------------------------------------------
def init_latent_generator_params(key, noise_dim, latent_size, neurons_count):
    """PyTorch-style init: U(-1/sqrt(fan_in), 1/sqrt(fan_in)).

    Weights are stored (in_features, out_features) so the kernel can do h @ W.
    """
    dims = ([(noise_dim, neurons_count)]
            + [(neurons_count, neurons_count)] * 4
            + [(neurons_count, latent_size)])
    params = []
    for fan_in, fan_out in dims:
        key, kw, kb = jax.random.split(key, 3)
        bound = 1.0 / math.sqrt(fan_in)
        w = jax.random.uniform(kw, (fan_in, fan_out), jnp.float32, -bound, bound)
        b = jax.random.uniform(kb, (1, fan_out), jnp.float32, -bound, bound)
        params.append((w, b))
    return params


def latent_generator_reference(x, params):
    """Pure-JAX reference mimicking the kernel's bf16-operand / f32-accum
    matmul precision so the comparison tolerance can stay tight."""
    h = x.astype(jnp.float32)
    n = len(params)
    for idx, (w, b) in enumerate(params):
        a = h.astype(jnp.bfloat16).astype(jnp.float32)
        wf = w.astype(jnp.bfloat16).astype(jnp.float32)
        y = jnp.dot(a, wf, precision=jax.lax.Precision.HIGHEST) + b
        h = jnp.where(y > 0, y, NEG_SLOPE * y) if idx < n - 1 else y
    return h


if __name__ == "__main__":
    # Small, forward-consistent shapes.
    noise_dim = 32
    latent_size = 16
    neurons_count = 128

    key = jax.random.PRNGKey(0)
    key, kx = jax.random.split(key)
    params = init_latent_generator_params(key, noise_dim, latent_size,
                                          neurons_count)
    prepared = prepare_latent_generator(params)   # one-time pad + bf16 cast

    # Main check: batch splits into 2 even grid steps (dual-TC friendly).
    batch = 64
    x = jax.random.normal(kx, (batch, noise_dim), dtype=jnp.float32)
    out = jax.block_until_ready(latent_generator_forward(x, prepared))
    assert out.shape == (batch, latent_size)
    ref = latent_generator_reference(x, params)
    assert jnp.allclose(out, ref, atol=1e-2, rtol=1e-2), (
        "mismatch vs reference, max abs err = "
        f"{float(jnp.max(jnp.abs(out - ref)))}")

    # Secondary check: odd batch size exercises the batch / lane padding path.
    x_small = x[:20]
    out_small = jax.block_until_ready(latent_generator_forward(x_small, prepared))
    assert out_small.shape == (20, latent_size)
    ref_small = latent_generator_reference(x_small, params)
    assert jnp.allclose(out_small, ref_small, atol=1e-2, rtol=1e-2), (
        "mismatch vs reference (small batch), max abs err = "
        f"{float(jnp.max(jnp.abs(out_small - ref_small)))}")

    print("KERNEL_OK")
</pallas_src>

<mosaic_0001>
module attributes {stable_mosaic.version = 11 : i64} {
  func.func @_latent_generator_kernel(%arg0: i32, %arg1: memref<32x128xbf16, #tpu.memory_space<vmem>>, %arg2: memref<128x128xbf16, #tpu.memory_space<vmem>>, %arg3: memref<1x128xf32, #tpu.memory_space<vmem>>, %arg4: memref<128x128xbf16, #tpu.memory_space<vmem>>, %arg5: memref<1x128xf32, #tpu.memory_space<vmem>>, %arg6: memref<128x128xbf16, #tpu.memory_space<vmem>>, %arg7: memref<1x128xf32, #tpu.memory_space<vmem>>, %arg8: memref<128x128xbf16, #tpu.memory_space<vmem>>, %arg9: memref<1x128xf32, #tpu.memory_space<vmem>>, %arg10: memref<128x128xbf16, #tpu.memory_space<vmem>>, %arg11: memref<1x128xf32, #tpu.memory_space<vmem>>, %arg12: memref<128x128xbf16, #tpu.memory_space<vmem>>, %arg13: memref<1x128xf32, #tpu.memory_space<vmem>>, %arg14: memref<32x128xf32, #tpu.memory_space<vmem>>) attributes {dimension_semantics = [#tpu.dimension_semantics<parallel>], iteration_bounds = array<i64: 2>, scalar_prefetch = 0 : i64, scratch_operands = 0 : i64, tpu.core_type = #tpu.core_type<tc>, window_params = [{transform_indices = @transform_0, window_bounds = array<i64: 32, 128>}, {pipeline_mode = #tpu.pipeline_mode<synchronous>, transform_indices = @transform_1, window_bounds = array<i64: 128, 128>}, {pipeline_mode = #tpu.pipeline_mode<synchronous>, transform_indices = @transform_2, window_bounds = array<i64: 1, 128>}, {pipeline_mode = #tpu.pipeline_mode<synchronous>, transform_indices = @transform_3, window_bounds = array<i64: 128, 128>}, {pipeline_mode = #tpu.pipeline_mode<synchronous>, transform_indices = @transform_4, window_bounds = array<i64: 1, 128>}, {pipeline_mode = #tpu.pipeline_mode<synchronous>, transform_indices = @transform_5, window_bounds = array<i64: 128, 128>}, {pipeline_mode = #tpu.pipeline_mode<synchronous>, transform_indices = @transform_6, window_bounds = array<i64: 1, 128>}, {pipeline_mode = #tpu.pipeline_mode<synchronous>, transform_indices = @transform_7, window_bounds = array<i64: 128, 128>}, {pipeline_mode = #tpu.pipeline_mode<synchronous>, transform_indices = @transform_8, window_bounds = array<i64: 1, 128>}, {pipeline_mode = #tpu.pipeline_mode<synchronous>, transform_indices = @transform_9, window_bounds = array<i64: 128, 128>}, {pipeline_mode = #tpu.pipeline_mode<synchronous>, transform_indices = @transform_10, window_bounds = array<i64: 1, 128>}, {pipeline_mode = #tpu.pipeline_mode<synchronous>, transform_indices = @transform_11, window_bounds = array<i64: 128, 128>}, {pipeline_mode = #tpu.pipeline_mode<synchronous>, transform_indices = @transform_12, window_bounds = array<i64: 1, 128>}, {transform_indices = @transform_13, window_bounds = array<i64: 32, 128>}]} {
    %c0 = arith.constant 0 : index
    %c0_0 = arith.constant 0 : index
    %0 = vector.load %arg2[%c0, %c0_0] : memref<128x128xbf16, #tpu.memory_space<vmem>>, vector<128x128xbf16>
    %c0_1 = arith.constant 0 : index
    %c0_2 = arith.constant 0 : index
    %1 = vector.load %arg4[%c0_1, %c0_2] : memref<128x128xbf16, #tpu.memory_space<vmem>>, vector<128x128xbf16>
    %c0_3 = arith.constant 0 : index
    %c0_4 = arith.constant 0 : index
    %2 = vector.load %arg6[%c0_3, %c0_4] : memref<128x128xbf16, #tpu.memory_space<vmem>>, vector<128x128xbf16>
    %c0_5 = arith.constant 0 : index
    %c0_6 = arith.constant 0 : index
    %3 = vector.load %arg8[%c0_5, %c0_6] : memref<128x128xbf16, #tpu.memory_space<vmem>>, vector<128x128xbf16>
    %c0_7 = arith.constant 0 : index
    %c0_8 = arith.constant 0 : index
    %4 = vector.load %arg10[%c0_7, %c0_8] : memref<128x128xbf16, #tpu.memory_space<vmem>>, vector<128x128xbf16>
    %c0_9 = arith.constant 0 : index
    %c0_10 = arith.constant 0 : index
    %5 = vector.load %arg12[%c0_9, %c0_10] : memref<128x128xbf16, #tpu.memory_space<vmem>>, vector<128x128xbf16>
    %c0_11 = arith.constant 0 : index
    %c0_12 = arith.constant 0 : index
    %6 = vector.load %arg3[%c0_11, %c0_12] : memref<1x128xf32, #tpu.memory_space<vmem>>, vector<1x128xf32>
    %c0_13 = arith.constant 0 : index
    %c0_14 = arith.constant 0 : index
    %7 = vector.load %arg5[%c0_13, %c0_14] : memref<1x128xf32, #tpu.memory_space<vmem>>, vector<1x128xf32>
    %c0_15 = arith.constant 0 : index
    %c0_16 = arith.constant 0 : index
    %8 = vector.load %arg7[%c0_15, %c0_16] : memref<1x128xf32, #tpu.memory_space<vmem>>, vector<1x128xf32>
    %c0_17 = arith.constant 0 : index
    %c0_18 = arith.constant 0 : index
    %9 = vector.load %arg9[%c0_17, %c0_18] : memref<1x128xf32, #tpu.memory_space<vmem>>, vector<1x128xf32>
    %c0_19 = arith.constant 0 : index
    %c0_20 = arith.constant 0 : index
    %10 = vector.load %arg11[%c0_19, %c0_20] : memref<1x128xf32, #tpu.memory_space<vmem>>, vector<1x128xf32>
    %c0_21 = arith.constant 0 : index
    %c0_22 = arith.constant 0 : index
    %11 = vector.load %arg13[%c0_21, %c0_22] : memref<1x128xf32, #tpu.memory_space<vmem>>, vector<1x128xf32>
    %c0_23 = arith.constant 0 : index
    %c0_24 = arith.constant 0 : index
    %12 = vector.load %arg1[%c0_23, %c0_24] : memref<32x128xbf16, #tpu.memory_space<vmem>>, vector<32x128xbf16>
    %cst = arith.constant dense<0.000000e+00> : vector<32x128xf32>
    %13 = tpu.matmul %12, %0, %cst {dimension_numbers = #tpu.dot_dimension_numbers<[1], [0], [0], [1], [0, 0, 1, 1], [], []>} : vector<32x128xbf16>, vector<128x128xbf16>, vector<32x128xf32> -> vector<32x128xf32>
    %14 = vector.broadcast %6 : vector<1x128xf32> to vector<32x128xf32>
    %15 = arith.addf %13, %14 : vector<32x128xf32>
    %cst_25 = arith.constant 2.000000e-01 : f32
    %16 = vector.broadcast %cst_25 : f32 to vector<32x128xf32>
    %17 = arith.mulf %16, %15 : vector<32x128xf32>
    %18 = arith.maximumf %15, %17 : vector<32x128xf32>
    %19 = arith.truncf %18 : vector<32x128xf32> to vector<32x128xbf16>
    %cst_26 = arith.constant dense<0.000000e+00> : vector<32x128xf32>
    %20 = tpu.matmul %19, %1, %cst_26 {dimension_numbers = #tpu.dot_dimension_numbers<[1], [0], [0], [1], [0, 0, 1, 1], [], []>} : vector<32x128xbf16>, vector<128x128xbf16>, vector<32x128xf32> -> vector<32x128xf32>
    %21 = vector.broadcast %7 : vector<1x128xf32> to vector<32x128xf32>
    %22 = arith.addf %20, %21 : vector<32x128xf32>
    %cst_27 = arith.constant 2.000000e-01 : f32
    %23 = vector.broadcast %cst_27 : f32 to vector<32x128xf32>
    %24 = arith.mulf %23, %22 : vector<32x128xf32>
    %25 = arith.maximumf %22, %24 : vector<32x128xf32>
    %26 = arith.truncf %25 : vector<32x128xf32> to vector<32x128xbf16>
    %cst_28 = arith.constant dense<0.000000e+00> : vector<32x128xf32>
    %27 = tpu.matmul %26, %2, %cst_28 {dimension_numbers = #tpu.dot_dimension_numbers<[1], [0], [0], [1], [0, 0, 1, 1], [], []>} : vector<32x128xbf16>, vector<128x128xbf16>, vector<32x128xf32> -> vector<32x128xf32>
    %28 = vector.broadcast %8 : vector<1x128xf32> to vector<32x128xf32>
    %29 = arith.addf %27, %28 : vector<32x128xf32>
    %cst_29 = arith.constant 2.000000e-01 : f32
    %30 = vector.broadcast %cst_29 : f32 to vector<32x128xf32>
    %31 = arith.mulf %30, %29 : vector<32x128xf32>
    %32 = arith.maximumf %29, %31 : vector<32x128xf32>
    %33 = arith.truncf %32 : vector<32x128xf32> to vector<32x128xbf16>
    %cst_30 = arith.constant dense<0.000000e+00> : vector<32x128xf32>
    %34 = tpu.matmul %33, %3, %cst_30 {dimension_numbers = #tpu.dot_dimension_numbers<[1], [0], [0], [1], [0, 0, 1, 1], [], []>} : vector<32x128xbf16>, vector<128x128xbf16>, vector<32x128xf32> -> vector<32x128xf32>
    %35 = vector.broadcast %9 : vector<1x128xf32> to vector<32x128xf32>
    %36 = arith.addf %34, %35 : vector<32x128xf32>
    %cst_31 = arith.constant 2.000000e-01 : f32
    %37 = vector.broadcast %cst_31 : f32 to vector<32x128xf32>
    %38 = arith.mulf %37, %36 : vector<32x128xf32>
    %39 = arith.maximumf %36, %38 : vector<32x128xf32>
    %40 = arith.truncf %39 : vector<32x128xf32> to vector<32x128xbf16>
    %cst_32 = arith.constant dense<0.000000e+00> : vector<32x128xf32>
    %41 = tpu.matmul %40, %4, %cst_32 {dimension_numbers = #tpu.dot_dimension_numbers<[1], [0], [0], [1], [0, 0, 1, 1], [], []>} : vector<32x128xbf16>, vector<128x128xbf16>, vector<32x128xf32> -> vector<32x128xf32>
    %42 = vector.broadcast %10 : vector<1x128xf32> to vector<32x128xf32>
    %43 = arith.addf %41, %42 : vector<32x128xf32>
    %cst_33 = arith.constant 2.000000e-01 : f32
    %44 = vector.broadcast %cst_33 : f32 to vector<32x128xf32>
    %45 = arith.mulf %44, %43 : vector<32x128xf32>
    %46 = arith.maximumf %43, %45 : vector<32x128xf32>
    %47 = arith.truncf %46 : vector<32x128xf32> to vector<32x128xbf16>
    %cst_34 = arith.constant dense<0.000000e+00> : vector<32x128xf32>
    %48 = tpu.matmul %47, %5, %cst_34 {dimension_numbers = #tpu.dot_dimension_numbers<[1], [0], [0], [1], [0, 0, 1, 1], [], []>} : vector<32x128xbf16>, vector<128x128xbf16>, vector<32x128xf32> -> vector<32x128xf32>
    %49 = vector.broadcast %11 : vector<1x128xf32> to vector<32x128xf32>
    %50 = arith.addf %48, %49 : vector<32x128xf32>
    %c0_35 = arith.constant 0 : index
    %c0_36 = arith.constant 0 : index
    %51 = vector.load %arg14[%c0_35, %c0_36] : memref<32x128xf32, #tpu.memory_space<vmem>>, vector<32x128xf32>
    tpu.vector_store %arg14[%c0_35, %c0_36], %50 {strides = array<i32>} : memref<32x128xf32, #tpu.memory_space<vmem>>, vector<32x128xf32>,
    return
  }
  func.func @transform_0(%arg0: i32) -> (i32, i32) {
    %c0_i32 = arith.constant 0 : i32
    %c0_i32_0 = arith.constant 0 : i32
    return %arg0, %c0_i32 : i32, i32
  }
  func.func @transform_1(%arg0: i32) -> (i32, i32) {
    %c0_i32 = arith.constant 0 : i32
    %c0_i32_0 = arith.constant 0 : i32
    %c0_i32_1 = arith.constant 0 : i32
    return %c0_i32, %c0_i32_0 : i32, i32
  }
  func.func @transform_2(%arg0: i32) -> (i32, i32) {
    %c0_i32 = arith.constant 0 : i32
    %c0_i32_0 = arith.constant 0 : i32
    %c0_i32_1 = arith.constant 0 : i32
    return %c0_i32, %c0_i32_0 : i32, i32
  }
  func.func @transform_3(%arg0: i32) -> (i32, i32) {
    %c0_i32 = arith.constant 0 : i32
    %c0_i32_0 = arith.constant 0 : i32
    %c0_i32_1 = arith.constant 0 : i32
    return %c0_i32, %c0_i32_0 : i32, i32
  }
  func.func @transform_4(%arg0: i32) -> (i32, i32) {
    %c0_i32 = arith.constant 0 : i32
    %c0_i32_0 = arith.constant 0 : i32
    %c0_i32_1 = arith.constant 0 : i32
    return %c0_i32, %c0_i32_0 : i32, i32
  }
  func.func @transform_5(%arg0: i32) -> (i32, i32) {
    %c0_i32 = arith.constant 0 : i32
    %c0_i32_0 = arith.constant 0 : i32
    %c0_i32_1 = arith.constant 0 : i32
    return %c0_i32, %c0_i32_0 : i32, i32
  }
  func.func @transform_6(%arg0: i32) -> (i32, i32) {
    %c0_i32 = arith.constant 0 : i32
    %c0_i32_0 = arith.constant 0 : i32
    %c0_i32_1 = arith.constant 0 : i32
    return %c0_i32, %c0_i32_0 : i32, i32
  }
  func.func @transform_7(%arg0: i32) -> (i32, i32) {
    %c0_i32 = arith.constant 0 : i32
    %c0_i32_0 = arith.constant 0 : i32
    %c0_i32_1 = arith.constant 0 : i32
    return %c0_i32, %c0_i32_0 : i32, i32
  }
  func.func @transform_8(%arg0: i32) -> (i32, i32) {
    %c0_i32 = arith.constant 0 : i32
    %c0_i32_0 = arith.constant 0 : i32
    %c0_i32_1 = arith.constant 0 : i32
    return %c0_i32, %c0_i32_0 : i32, i32
  }
  func.func @transform_9(%arg0: i32) -> (i32, i32) {
    %c0_i32 = arith.constant 0 : i32
    %c0_i32_0 = arith.constant 0 : i32
    %c0_i32_1 = arith.constant 0 : i32
    return %c0_i32, %c0_i32_0 : i32, i32
  }
  func.func @transform_10(%arg0: i32) -> (i32, i32) {
    %c0_i32 = arith.constant 0 : i32
    %c0_i32_0 = arith.constant 0 : i32
    %c0_i32_1 = arith.constant 0 : i32
    return %c0_i32, %c0_i32_0 : i32, i32
  }
  func.func @transform_11(%arg0: i32) -> (i32, i32) {
    %c0_i32 = arith.constant 0 : i32
    %c0_i32_0 = arith.constant 0 : i32
    %c0_i32_1 = arith.constant 0 : i32
    return %c0_i32, %c0_i32_0 : i32, i32
  }
  func.func @transform_12(%arg0: i32) -> (i32, i32) {
    %c0_i32 = arith.constant 0 : i32
    %c0_i32_0 = arith.constant 0 : i32
    %c0_i32_1 = arith.constant 0 : i32
    return %c0_i32, %c0_i32_0 : i32, i32
  }
  func.func @transform_13(%arg0: i32) -> (i32, i32) {
    %c0_i32 = arith.constant 0 : i32
    %c0_i32_0 = arith.constant 0 : i32
    return %arg0, %c0_i32 : i32, i32
  }
}

</mosaic_0001>

<llo_original>
// kernel: _latent_generator_forward_impl.1
$region0: #{_latent_generator_forward_impl.1}
  #allocation0 [shape = 'u32[]', space=smem, size = 0x4, offset = 0x4, fixed_abs, tag = 'smem constant byte address 0x4 - core index']
  #allocation1 [shape = 'u32[72,128]{1,0:T(1,128)}', space=vmem, size = 0x9000, scoped, tag = 'internal scratch']
  %s0 = inlined_call_operand.vmem [shape: bf16[64,128], index: 0, kind: input, shape index: {}]
  %s1 = inlined_call_operand.vmem [shape: bf16[128,128], index: 1, kind: input, shape index: {}]
  %s2 = inlined_call_operand.vmem [shape: f32[1,128], index: 2, kind: input, shape index: {}]
  %s3 = inlined_call_operand.vmem [shape: bf16[128,128], index: 3, kind: input, shape index: {}]
  %s4 = inlined_call_operand.vmem [shape: f32[1,128], index: 4, kind: input, shape index: {}]
  %s5 = inlined_call_operand.hbm [shape: bf16[128,128], index: 5, kind: input, shape index: {}]
  %s6 = inlined_call_operand.vmem [shape: f32[1,128], index: 6, kind: input, shape index: {}]
  %s7 = inlined_call_operand.hbm [shape: bf16[128,128], index: 7, kind: input, shape index: {}]
  %s8 = inlined_call_operand.vmem [shape: f32[1,128], index: 8, kind: input, shape index: {}]
  %s9 = inlined_call_operand.hbm [shape: bf16[128,128], index: 9, kind: input, shape index: {}]
  %s10 = inlined_call_operand.vmem [shape: f32[1,128], index: 10, kind: input, shape index: {}]
  %s11 = inlined_call_operand.hbm [shape: bf16[128,128], index: 11, kind: input, shape index: {}]
  %s12 = inlined_call_operand.vmem [shape: f32[1,128], index: 12, kind: input, shape index: {}]
  %s13 = inlined_call_operand.vmem [shape: f32[64,128], index: 13, kind: output, shape index: {}]
  %s14 = sld [smem:[#allocation0]]
  $region101: #{_latent_generator_forward_impl.1} parent=0
    _
  %s16 = ssub.s32 1, %s14
  %s17 = scalar_select 0, %s16, %s14
  $region1: #{_latent_generator_forward_impl.1} parent=0
    #allocation2 [shape = 'u8[32768]{0}', space=vmem, size = 0x8000, scoped, tag = 'input window, operand 5, single buffered']
    #allocation3 [shape = 's32[2]{0}', space=sflag, size = 0x8, scoped, tag = 'scoped memory for _latent_generator_forward_impl.1']
    #allocation4 [shape = 'u8[32768]{0}', space=vmem, size = 0x8000, scoped, tag = 'input window, operand 7, single buffered']
    #allocation5 [shape = 's32[1]{0}', space=sflag, size = 0x4, scoped, tag = 'scoped memory for _latent_generator_forward_impl.1']
    #allocation6 [shape = 'u8[32768]{0}', space=vmem, size = 0x8000, scoped, tag = 'input window, operand 9, single buffered']
    #allocation7 [shape = 'u8[32768]{0}', space=vmem, size = 0x8000, scoped, tag = 'input window, operand 11, single buffered']
    #allocation8 [shape = 's32[1]{0}', space=sflag, size = 0x4, scoped, tag = 'scoped memory for _latent_generator_forward_impl.1']
    %18 = vsyncpa [#allocation3], 0
    %19 = vsyncpa [#allocation5], 0
    %20 = vsyncpa [#allocation8], 0
    loop: start=0, step=1, limit=4
    $region2: #{_latent_generator_forward_impl.1} parent=1 // loop_pre_header
      _
    $region3: #{_latent_generator_forward_impl.1} parent=1 // loop_header
      %s22 = sphi 0, %s26
      %p23 = scmp.ge.s32.totalorder %s22, 4
      %s32 = sphi 0, %s34
      %s35 = sphi 0, %s32
      %s36 = sphi 0, %s35
      %s52 = sphi 0, %s36
      %s56 = sphi 0, %s56
      %s58 = sphi 0, %s56
      %s59 = sphi 0, %s58
      %s73 = sphi 0, %s59
      %s77 = sphi 0, %s77
      %s79 = sphi 0, %s77
      %s80 = sphi 0, %s79
      %s94 = sphi 0, %s80
      %s98 = sphi 0, %s98
      %s100 = sphi 0, %s98
      %s101 = sphi 0, %s100
      %s115 = sphi 0, %s101
      %s119 = sphi 0, %s119
      %s121 = sphi 0, %s119
      %s122 = sphi 0, %s121
      %s136 = sphi 0, %s122
      %s140 = sphi 0, %s140
      %s142 = sphi 0, %s140
      %s143 = sphi 0, %s142
      %s157 = sphi 0, %s143
      %s161 = sphi 0, %s161
      %s163 = sphi 0, %s161
      %s164 = sphi 0, %s163
      %s178 = sphi 0, %s164
      %s182 = sphi 0, %s182
      %s184 = sphi 0, %s182
      %s185 = sphi 0, %s184
      %s199 = sphi 0, %s185
      %s203 = sphi 0, %s203
      %s205 = sphi 0, %s203
      %s206 = sphi 0, %s205
      %s220 = sphi 0, %s206
      %s224 = sphi 0, %s224
      %s226 = sphi 0, %s224
      %s227 = sphi 0, %s226
      %s241 = sphi 0, %s227
      %s245 = sphi 0, %s245
      %s247 = sphi 0, %s245
      %s248 = sphi 0, %s247
      %s262 = sphi 0, %s248
      %s266 = sphi 0, %s266
      %s268 = sphi 0, %s266
      %s269 = sphi 0, %s268
      %s283 = sphi 0, %s269
      %s287 = sphi 0, %s287
      %s289 = sphi 0, %s287
      %s290 = sphi 0, %s289
      %s304 = sphi 0, %s290
      %s310 = sphi 0, %s312
      %s313 = sphi 0, %s310
      %s314 = sphi 0, %s313
      %s330 = sphi 0, %s314
    $region4: #{_latent_generator_forward_impl.1} parent=1 // loop_header_branch
      %25 = sbr.rel (%p23) target = $region8
    $region5: #{_latent_generator_forward_impl.1} parent=1 // loop_body
      %s27 = ssub.s32 %s22, 1
      %s28 = ssub.s32 %s22, 2
      %s29 = sadd.s32 %s22, 1
      %s30 = ssub.s32 %s22, %s29
      %p31 = scmp.eq.s32.totalorder %s30, 0
      %s33 = sadd.s32 %s32, 1
      %s34 = scalar_select %p31, %s32, %s33
      %p37 = pneg %p31
      %p38 = scmp.eq.s32.totalorder %s22, 1
      %p39 = por %p37, %p38
      %p40 = scmp.ne.s32.totalorder %s32, %s35
      %p41 = scmp.eq.s32.totalorder %s22, 0
      %p42 = por %p40, %p41
      %p43 = scmp.ne.s32.totalorder %s32, %s35
      %p44 = scmp.eq.s32.totalorder %s27, 1
      %p45 = por %p43, %p44
      %p46 = scmp.ne.s32.totalorder %s35, %s36
      %p47 = scmp.eq.s32.totalorder %s27, 0
      %p48 = por %p46, %p47
      %p49 = scmp.ne.s32.totalorder %s35, %s36
      %p50 = scmp.eq.s32.totalorder %s28, 1
      %p51 = por %p49, %p50
      %p53 = scmp.ne.s32.totalorder %s36, %s52
      %p54 = scmp.eq.s32.totalorder %s28, 0
      %p55 = por %p53, %p54
      %s57 = sadd.s32 %s56, 1
      %p60 = scmp.eq.s32.totalorder %s22, 1
      %p61 = scmp.ne.s32.totalorder %s56, %s58
      %p62 = scmp.eq.s32.totalorder %s22, 0
      %p63 = por %p61, %p62
      %p64 = scmp.ne.s32.totalorder %s56, %s58
      %p65 = scmp.eq.s32.totalorder %s27, 1
      %p66 = por %p64, %p65
      %p67 = scmp.ne.s32.totalorder %s58, %s59
      %p68 = scmp.eq.s32.totalorder %s27, 0
      %p69 = por %p67, %p68
      %p70 = scmp.ne.s32.totalorder %s58, %s59
      %p71 = scmp.eq.s32.totalorder %s28, 1
      %p72 = por %p70, %p71
      %p74 = scmp.ne.s32.totalorder %s59, %s73
      %p75 = scmp.eq.s32.totalorder %s28, 0
      %p76 = por %p74, %p75
      %s78 = sadd.s32 %s77, 1
      %p81 = scmp.eq.s32.totalorder %s22, 1
      %p82 = scmp.ne.s32.totalorder %s77, %s79
      %p83 = scmp.eq.s32.totalorder %s22, 0
      %p84 = por %p82, %p83
      %p85 = scmp.ne.s32.totalorder %s77, %s79
      %p86 = scmp.eq.s32.totalorder %s27, 1
      %p87 = por %p85, %p86
      %p88 = scmp.ne.s32.totalorder %s79, %s80
      %p89 = scmp.eq.s32.totalorder %s27, 0
      %p90 = por %p88, %p89
      %p91 = scmp.ne.s32.totalorder %s79, %s80
      %p92 = scmp.eq.s32.totalorder %s28, 1
      %p93 = por %p91, %p92
      %p95 = scmp.ne.s32.totalorder %s80, %s94
      %p96 = scmp.eq.s32.totalorder %s28, 0
      %p97 = por %p95, %p96
      %s99 = sadd.s32 %s98, 1
      %p102 = scmp.eq.s32.totalorder %s22, 1
      %p103 = scmp.ne.s32.totalorder %s98, %s100
      %p104 = scmp.eq.s32.totalorder %s22, 0
      %p105 = por %p103, %p104
      %p106 = scmp.ne.s32.totalorder %s98, %s100
      %p107 = scmp.eq.s32.totalorder %s27, 1
      %p108 = por %p106, %p107
      %p109 = scmp.ne.s32.totalorder %s100, %s101
      %p110 = scmp.eq.s32.totalorder %s27, 0
      %p111 = por %p109, %p110
      %p112 = scmp.ne.s32.totalorder %s100, %s101
      %p113 = scmp.eq.s32.totalorder %s28, 1
      %p114 = por %p112, %p113
      %p116 = scmp.ne.s32.totalorder %s101, %s115
      %p117 = scmp.eq.s32.totalorder %s28, 0
      %p118 = por %p116, %p117
      %s120 = sadd.s32 %s119, 1
      %p123 = scmp.eq.s32.totalorder %s22, 1
      %p124 = scmp.ne.s32.totalorder %s119, %s121
      %p125 = scmp.eq.s32.totalorder %s22, 0
      %p126 = por %p124, %p125
      %p127 = scmp.ne.s32.totalorder %s119, %s121
      %p128 = scmp.eq.s32.totalorder %s27, 1
      %p129 = por %p127, %p128
      %p130 = scmp.ne.s32.totalorder %s121, %s122
      %p131 = scmp.eq.s32.totalorder %s27, 0
      %p132 = por %p130, %p131
      %p133 = scmp.ne.s32.totalorder %s121, %s122
      %p134 = scmp.eq.s32.totalorder %s28, 1
      %p135 = por %p133, %p134
      %p137 = scmp.ne.s32.totalorder %s122, %s136
      %p138 = scmp.eq.s32.totalorder %s28, 0
      %p139 = por %p137, %p138
      %s141 = sadd.s32 %s140, 1
      %p144 = scmp.eq.s32.totalorder %s22, 1
      %p145 = scmp.ne.s32.totalorder %s140, %s142
      %p146 = scmp.eq.s32.totalorder %s22, 0
      %p147 = por %p145, %p146
      %p148 = scmp.ne.s32.totalorder %s140, %s142
      %p149 = scmp.eq.s32.totalorder %s27, 1
      %p150 = por %p148, %p149
      %p151 = scmp.ne.s32.totalorder %s142, %s143
      %p152 = scmp.eq.s32.totalorder %s27, 0
      %p153 = por %p151, %p152
      %p154 = scmp.ne.s32.totalorder %s142, %s143
      %p155 = scmp.eq.s32.totalorder %s28, 1
      %p156 = por %p154, %p155
      %p158 = scmp.ne.s32.totalorder %s143, %s157
      %p159 = scmp.eq.s32.totalorder %s28, 0
      %p160 = por %p158, %p159
      %s162 = sadd.s32 %s161, 1
      %p165 = scmp.eq.s32.totalorder %s22, 1
      %p166 = scmp.ne.s32.totalorder %s161, %s163
      %p167 = scmp.eq.s32.totalorder %s22, 0
      %p168 = por %p166, %p167
      %p169 = scmp.ne.s32.totalorder %s161, %s163
      %p170 = scmp.eq.s32.totalorder %s27, 1
      %p171 = por %p169, %p170
      %p172 = scmp.ne.s32.totalorder %s163, %s164
      %p173 = scmp.eq.s32.totalorder %s27, 0
      %p174 = por %p172, %p173
      %p175 = scmp.ne.s32.totalorder %s163, %s164
      %p176 = scmp.eq.s32.totalorder %s28, 1
      %p177 = por %p175, %p176
      %p179 = scmp.ne.s32.totalorder %s164, %s178
      %p180 = scmp.eq.s32.totalorder %s28, 0
      %p181 = por %p179, %p180
      %s183 = sadd.s32 %s182, 1
      %p186 = scmp.eq.s32.totalorder %s22, 1
      %p187 = scmp.ne.s32.totalorder %s182, %s184
      %p188 = scmp.eq.s32.totalorder %s22, 0
      %p189 = por %p187, %p188
      %p190 = scmp.ne.s32.totalorder %s182, %s184
      %p191 = scmp.eq.s32.totalorder %s27, 1
      %p192 = por %p190, %p191
      %p193 = scmp.ne.s32.totalorder %s184, %s185
      %p194 = scmp.eq.s32.totalorder %s27, 0
      %p195 = por %p193, %p194
      %p196 = scmp.ne.s32.totalorder %s184, %s185
      %p197 = scmp.eq.s32.totalorder %s28, 1
      %p198 = por %p196, %p197
      %p200 = scmp.ne.s32.totalorder %s185, %s199
      %p201 = scmp.eq.s32.totalorder %s28, 0
      %p202 = por %p200, %p201
      %s204 = sadd.s32 %s203, 1
      %p207 = scmp.eq.s32.totalorder %s22, 1
      %p208 = scmp.ne.s32.totalorder %s203, %s205
      %p209 = scmp.eq.s32.totalorder %s22, 0
      %p210 = por %p208, %p209
      %p211 = scmp.ne.s32.totalorder %s203, %s205
      %p212 = scmp.eq.s32.totalorder %s27, 1
      %p213 = por %p211, %p212
      %p214 = scmp.ne.s32.totalorder %s205, %s206
      %p215 = scmp.eq.s32.totalorder %s27, 0
      %p216 = por %p214, %p215
      %p217 = scmp.ne.s32.totalorder %s205, %s206
      %p218 = scmp.eq.s32.totalorder %s28, 1
      %p219 = por %p217, %p218
      %p221 = scmp.ne.s32.totalorder %s206, %s220
      %p222 = scmp.eq.s32.totalorder %s28, 0
      %p223 = por %p221, %p222
      %s225 = sadd.s32 %s224, 1
      %p228 = scmp.eq.s32.totalorder %s22, 1
      %p229 = scmp.ne.s32.totalorder %s224, %s226
      %p230 = scmp.eq.s32.totalorder %s22, 0
      %p231 = por %p229, %p230
      %p232 = scmp.ne.s32.totalorder %s224, %s226
      %p233 = scmp.eq.s32.totalorder %s27, 1
      %p234 = por %p232, %p233
      %p235 = scmp.ne.s32.totalorder %s226, %s227
      %p236 = scmp.eq.s32.totalorder %s27, 0
      %p237 = por %p235, %p236
      %p238 = scmp.ne.s32.totalorder %s226, %s227
      %p239 = scmp.eq.s32.totalorder %s28, 1
      %p240 = por %p238, %p239
      %p242 = scmp.ne.s32.totalorder %s227, %s241
      %p243 = scmp.eq.s32.totalorder %s28, 0
      %p244 = por %p242, %p243
      %s246 = sadd.s32 %s245, 1
      %p249 = scmp.eq.s32.totalorder %s22, 1
      %p250 = scmp.ne.s32.totalorder %s245, %s247
      %p251 = scmp.eq.s32.totalorder %s22, 0
      %p252 = por %p250, %p251
      %p253 = scmp.ne.s32.totalorder %s245, %s247
      %p254 = scmp.eq.s32.totalorder %s27, 1
      %p255 = por %p253, %p254
      %p256 = scmp.ne.s32.totalorder %s247, %s248
      %p257 = scmp.eq.s32.totalorder %s27, 0
      %p258 = por %p256, %p257
      %p259 = scmp.ne.s32.totalorder %s247, %s248
      %p260 = scmp.eq.s32.totalorder %s28, 1
      %p261 = por %p259, %p260
      %p263 = scmp.ne.s32.totalorder %s248, %s262
      %p264 = scmp.eq.s32.totalorder %s28, 0
      %p265 = por %p263, %p264
      %s267 = sadd.s32 %s266, 1
      %p270 = scmp.eq.s32.totalorder %s22, 1
      %p271 = scmp.ne.s32.totalorder %s266, %s268
      %p272 = scmp.eq.s32.totalorder %s22, 0
      %p273 = por %p271, %p272
      %p274 = scmp.ne.s32.totalorder %s266, %s268
      %p275 = scmp.eq.s32.totalorder %s27, 1
      %p276 = por %p274, %p275
      %p277 = scmp.ne.s32.totalorder %s268, %s269
      %p278 = scmp.eq.s32.totalorder %s27, 0
      %p279 = por %p277, %p278
      %p280 = scmp.ne.s32.totalorder %s268, %s269
      %p281 = scmp.eq.s32.totalorder %s28, 1
      %p282 = por %p280, %p281
      %p284 = scmp.ne.s32.totalorder %s269, %s283
      %p285 = scmp.eq.s32.totalorder %s28, 0
      %p286 = por %p284, %p285
      %s288 = sadd.s32 %s287, 1
      %p291 = scmp.eq.s32.totalorder %s22, 1
      %p292 = scmp.ne.s32.totalorder %s287, %s289
      %p293 = scmp.eq.s32.totalorder %s22, 0
      %p294 = por %p292, %p293
      %p295 = scmp.ne.s32.totalorder %s287, %s289
      %p296 = scmp.eq.s32.totalorder %s27, 1
      %p297 = por %p295, %p296
      %p298 = scmp.ne.s32.totalorder %s289, %s290
      %p299 = scmp.eq.s32.totalorder %s27, 0
      %p300 = por %p298, %p299
      %p301 = scmp.ne.s32.totalorder %s289, %s290
      %p302 = scmp.eq.s32.totalorder %s28, 1
      %p303 = por %p301, %p302
      %p305 = scmp.ne.s32.totalorder %s290, %s304
      %p306 = scmp.eq.s32.totalorder %s28, 0
      %p307 = por %p305, %p306
      %s308 = ssub.s32 %s22, %s29
      %p309 = scmp.eq.s32.totalorder %s308, 0
      %s311 = sadd.s32 %s310, 1
      %s312 = scalar_select %p309, %s310, %s311
      %p315 = pneg %p309
      %p316 = scmp.eq.s32.totalorder %s22, 1
      %p317 = por %p315, %p316
      %p318 = scmp.ne.s32.totalorder %s310, %s313
      %p319 = scmp.eq.s32.totalorder %s22, 0
      %p320 = por %p318, %p319
      %p321 = scmp.ne.s32.totalorder %s310, %s313
      %p322 = scmp.eq.s32.totalorder %s27, 1
      %p323 = por %p321, %p322
      %p324 = scmp.ne.s32.totalorder %s313, %s314
      %p325 = scmp.eq.s32.totalorder %s27, 0
      %p326 = por %p324, %p325
      %p327 = scmp.ne.s32.totalorder %s313, %s314
      %p328 = scmp.eq.s32.totalorder %s28, 1
      %p329 = por %p327, %p328
      %p331 = scmp.ne.s32.totalorder %s314, %s330
      %p332 = scmp.eq.s32.totalorder %s28, 0
      %p333 = por %p331, %p332
      %p334 = scmp.le.s32.totalorder 1, %s22
      %p335 = scmp.lt.s32.totalorder %s22, 3
      %p336 = pnand %p334, %p335
      %p337 = pneg %p336
      // Predicated region
      $region9: #{_latent_generator_forward_impl.1} parent=5 // pred_check
        _
      $region10: #{_latent_generator_forward_impl.1} parent=5 // pred_check_branch
        %339 = sbr.rel (%p336) target = $region12
      $region11: #{_latent_generator_forward_impl.1} parent=5 // pred_region
        %s340 = ssub.s32 %s22, 1
        // Predicated region
        $region13: #{_latent_generator_forward_impl.1} parent=11 // pred_check
          %p341 = pneg %p69
        $region14: #{_latent_generator_forward_impl.1} parent=11 // pred_check_branch
          %343 = sbr.rel (%p341) target = $region16
        $region15: #{_latent_generator_forward_impl.1} parent=11 // pred_region
          _
        $region16: #{_latent_generator_forward_impl.1} parent=11 // pred_fallthru
          _
        // Predicated region
        $region17: #{_latent_generator_forward_impl.1} parent=11 // pred_check
          %p344 = pneg %p90
        $region18: #{_latent_generator_forward_impl.1} parent=11 // pred_check_branch
          %346 = sbr.rel (%p344) target = $region20
        $region19: #{_latent_generator_forward_impl.1} parent=11 // pred_region
          _
        $region20: #{_latent_generator_forward_impl.1} parent=11 // pred_fallthru
          _
        // Predicated region
        $region21: #{_latent_generator_forward_impl.1} parent=11 // pred_check
          %p347 = pneg %p111
        $region22: #{_latent_generator_forward_impl.1} parent=11 // pred_check_branch
          %349 = sbr.rel (%p347) target = $region24
        $region23: #{_latent_generator_forward_impl.1} parent=11 // pred_region
          _
        $region24: #{_latent_generator_forward_impl.1} parent=11 // pred_fallthru
          _
        // Predicated region
        $region25: #{_latent_generator_forward_impl.1} parent=11 // pred_check
          %p350 = pneg %p132
        $region26: #{_latent_generator_forward_impl.1} parent=11 // pred_check_branch
          %352 = sbr.rel (%p350) target = $region28
        $region27: #{_latent_generator_forward_impl.1} parent=11 // pred_region
          _
        $region28: #{_latent_generator_forward_impl.1} parent=11 // pred_fallthru
          _
        // Predicated region
        $region29: #{_latent_generator_forward_impl.1} parent=11 // pred_check
          %p353 = pneg %p153
        $region30: #{_latent_generator_forward_impl.1} parent=11 // pred_check_branch
          %355 = sbr.rel (%p353) target = $region32
        $region31: #{_latent_generator_forward_impl.1} parent=11 // pred_region
          %357 = vsyncadd [#allocation3], 0
          %s358 = sshll.u32 %s5, 4
          %s359 = int_to_ptr.hbm [resolvable:$true] %s358
          %s360 = sshll.u32 [#allocation2], 4
          %s361 = int_to_ptr.vmem [resolvable:$true] %s360
          %366 = dma.hbm_to_vmem [thread:$0]  %s359, 1024, %s361, [#allocation3], 64, 64, 4
        $region32: #{_latent_generator_forward_impl.1} parent=11 // pred_fallthru
          _
        // Predicated region
        $region33: #{_latent_generator_forward_impl.1} parent=11 // pred_check
          %p367 = pneg %p174
        $region34: #{_latent_generator_forward_impl.1} parent=11 // pred_check_branch
          %369 = sbr.rel (%p367) target = $region36
        $region35: #{_latent_generator_forward_impl.1} parent=11 // pred_region
          _
        $region36: #{_latent_generator_forward_impl.1} parent=11 // pred_fallthru
          _
        // Predicated region
        $region37: #{_latent_generator_forward_impl.1} parent=11 // pred_check
          %p370 = pneg %p195
        $region38: #{_latent_generator_forward_impl.1} parent=11 // pred_check_branch
          %372 = sbr.rel (%p370) target = $region40
        $region39: #{_latent_generator_forward_impl.1} parent=11 // pred_region
          %374 = vsyncadd [#allocation5], 0
          %s375 = sshll.u32 %s7, 4
          %s376 = int_to_ptr.hbm [resolvable:$true] %s375
          %s377 = sshll.u32 [#allocation4], 4
          %s378 = int_to_ptr.vmem [resolvable:$true] %s377
          %383 = dma.hbm_to_vmem [thread:$0]  %s376, 1024, %s378, [#allocation5], 64, 64, 4
        $region40: #{_latent_generator_forward_impl.1} parent=11 // pred_fallthru
          _
        // Predicated region
        $region41: #{_latent_generator_forward_impl.1} parent=11 // pred_check
          %p384 = pneg %p216
        $region42: #{_latent_generator_forward_impl.1} parent=11 // pred_check_branch
          %386 = sbr.rel (%p384) target = $region44
        $region43: #{_latent_generator_forward_impl.1} parent=11 // pred_region
          _
        $region44: #{_latent_generator_forward_impl.1} parent=11 // pred_fallthru
          _
        // Predicated region
        $region45: #{_latent_generator_forward_impl.1} parent=11 // pred_check
          %p387 = pneg %p237
        $region46: #{_latent_generator_forward_impl.1} parent=11 // pred_check_branch
          %389 = sbr.rel (%p387) target = $region48
        $region47: #{_latent_generator_forward_impl.1} parent=11 // pred_region
          %391 = vsyncadd [#allocation5], 0
          %s392 = sshll.u32 %s9, 4
          %s393 = int_to_ptr.hbm [resolvable:$true] %s392
          %s394 = sshll.u32 [#allocation6], 4
          %s395 = int_to_ptr.vmem [resolvable:$true] %s394
          %400 = dma.hbm_to_vmem [thread:$0]  %s393, 1024, %s395, [#allocation5], 64, 64, 4
        $region48: #{_latent_generator_forward_impl.1} parent=11 // pred_fallthru
          _
        // Predicated region
        $region49: #{_latent_generator_forward_impl.1} parent=11 // pred_check
          %p401 = pneg %p258
        $region50: #{_latent_generator_forward_impl.1} parent=11 // pred_check_branch
          %403 = sbr.rel (%p401) target = $region52
        $region51: #{_latent_generator_forward_impl.1} parent=11 // pred_region
          _
        $region52: #{_latent_generator_forward_impl.1} parent=11 // pred_fallthru
          _
        // Predicated region
        $region53: #{_latent_generator_forward_impl.1} parent=11 // pred_check
          %p404 = pneg %p279
        $region54: #{_latent_generator_forward_impl.1} parent=11 // pred_check_branch
          %406 = sbr.rel (%p404) target = $region56
        $region55: #{_latent_generator_forward_impl.1} parent=11 // pred_region
          %408 = vsyncadd [#allocation8], 0
          %s409 = sshll.u32 %s11, 4
          %s410 = int_to_ptr.hbm [resolvable:$true] %s409
          %s411 = sshll.u32 [#allocation7], 4
          %s412 = int_to_ptr.vmem [resolvable:$true] %s411
          %417 = dma.hbm_to_vmem [thread:$0]  %s410, 1024, %s412, [#allocation8], 64, 64, 4
        $region56: #{_latent_generator_forward_impl.1} parent=11 // pred_fallthru
          _
        // Predicated region
        $region57: #{_latent_generator_forward_impl.1} parent=11 // pred_check
          %p418 = pneg %p300
        $region58: #{_latent_generator_forward_impl.1} parent=11 // pred_check_branch
          %420 = sbr.rel (%p418) target = $region60
        $region59: #{_latent_generator_forward_impl.1} parent=11 // pred_region
          _
        $region60: #{_latent_generator_forward_impl.1} parent=11 // pred_fallthru
          _
      $region12: #{_latent_generator_forward_impl.1} parent=5 // pred_fallthru
        _
      %p421 = scmp.lt.s32.totalorder %s22, 2
      // Predicated region
      $region61: #{_latent_generator_forward_impl.1} parent=5 // pred_check
        %p422 = pneg %p421
      $region62: #{_latent_generator_forward_impl.1} parent=5 // pred_check_branch
        %424 = sbr.rel (%p422) target = $region64
      $region63: #{_latent_generator_forward_impl.1} parent=5 // pred_region
        // Predicated region
        $region65: #{_latent_generator_forward_impl.1} parent=63 // pred_check
          %p425 = pneg %p42
        $region66: #{_latent_generator_forward_impl.1} parent=63 // pred_check_branch
          %427 = sbr.rel (%p425) target = $region68
        $region67: #{_latent_generator_forward_impl.1} parent=63 // pred_region
          %s428 = smul.u32 4, %s22
          %p429 = scmp.lt.s32.totalorder %s428, 7
          %s430 = scalar_select %p429, %s428, 7
          %s431 = smul.addr %s430, 4
          %s432 = scalar_lea.vmem %s0, %s431
          %s433 = smul.u32 4, %s22
        $region68: #{_latent_generator_forward_impl.1} parent=63 // pred_fallthru
          _
      $region64: #{_latent_generator_forward_impl.1} parent=5 // pred_fallthru
        _
      %p434 = scmp.le.s32.totalorder 1, %s22
      %p435 = scmp.lt.s32.totalorder %s22, 3
      %p436 = pnand %p434, %p435
      %p437 = pneg %p436
      // Predicated region
      $region69: #{_latent_generator_forward_impl.1} parent=5 // pred_check
        _
      $region70: #{_latent_generator_forward_impl.1} parent=5 // pred_check_branch
        %439 = sbr.rel (%p436) target = $region72
      $region71: #{_latent_generator_forward_impl.1} parent=5 // pred_region
        %s440 = ssub.s32 %s22, 1
        // Predicated region
        $region73: #{_latent_generator_forward_impl.1} parent=71 // pred_check
          %p441 = pneg %p153
        $region74: #{_latent_generator_forward_impl.1} parent=71 // pred_check_branch
          %443 = sbr.rel (%p441) target = $region76
        $region75: #{_latent_generator_forward_impl.1} parent=71 // pred_region
          %445 = dma.done [#allocation3], 1024
        $region76: #{_latent_generator_forward_impl.1} parent=71 // pred_fallthru
          _
        // Predicated region
        $region77: #{_latent_generator_forward_impl.1} parent=71 // pred_check
          %p446 = pneg %p195
        $region78: #{_latent_generator_forward_impl.1} parent=71 // pred_check_branch
          %448 = sbr.rel (%p446) target = $region80
        $region79: #{_latent_generator_forward_impl.1} parent=71 // pred_region
          %450 = dma.done [#allocation5], 1024
        $region80: #{_latent_generator_forward_impl.1} parent=71 // pred_fallthru
          _
        // Predicated region
        $region81: #{_latent_generator_forward_impl.1} parent=71 // pred_check
          %p451 = pneg %p237
        $region82: #{_latent_generator_forward_impl.1} parent=71 // pred_check_branch
          %453 = sbr.rel (%p451) target = $region84
        $region83: #{_latent_generator_forward_impl.1} parent=71 // pred_region
          %455 = dma.done [#allocation5], 1024
        $region84: #{_latent_generator_forward_impl.1} parent=71 // pred_fallthru
          _
        // Predicated region
        $region85: #{_latent_generator_forward_impl.1} parent=71 // pred_check
          %p456 = pneg %p279
        $region86: #{_latent_generator_forward_impl.1} parent=71 // pred_check_branch
          %458 = sbr.rel (%p456) target = $region88
        $region87: #{_latent_generator_forward_impl.1} parent=71 // pred_region
          %460 = dma.done [#allocation8], 1024
        $region88: #{_latent_generator_forward_impl.1} parent=71 // pred_fallthru
          _
        %s461 = smul.u32 4, %s27
        %p462 = scmp.lt.s32.totalorder %s461, 7
        %s463 = scalar_select %p462, %s461, 7
        %s464 = smul.addr %s463, 4
        %s465 = scalar_lea.vmem %s0, %s464
        %p466 = pneg %p48
        %p467 = pneg %p45
        %p468 = pneg %p69
        %p469 = pneg %p66
        %p470 = pneg %p90
        %p471 = pneg %p87
        %p472 = pneg %p111
        %p473 = pneg %p108
        %p474 = pneg %p132
        %p475 = pneg %p129
        %p476 = pneg %p153
        %p477 = pneg %p150
        %p478 = pneg %p174
        %p479 = pneg %p171
        %p480 = pneg %p195
        %p481 = pneg %p192
        %p482 = pneg %p216
        %p483 = pneg %p213
        %p484 = pneg %p237
        %p485 = pneg %p234
        %p486 = pneg %p258
        %p487 = pneg %p255
        %p488 = pneg %p279
        %p489 = pneg %p276
        %p490 = pneg %p300
        %p491 = pneg %p297
        %p492 = pneg %p326
        %p493 = pneg %p323
        %s494 = smul.u32 4, %s27
        %p495 = scmp.lt.s32.totalorder %s494, 7
        %s496 = scalar_select %p495, %s494, 7
        %s497 = smul.addr %s496, 8
        %s498 = scalar_lea.vmem %s13, %s497
        %s499 = smul.u32 4, %s27
        %p500 = scmp.lt.s32.totalorder %s499, 7
        %s501 = scalar_select %p500, %s499, 7
        %s502 = smul.addr %s501, 4
        %s503 = scalar_lea.vmem %s0, %s502
        %s504 = smul.u32 4, %s27
        %s505 = smul.u32 4, %s27
        %p506 = scmp.lt.s32.totalorder %s505, 7
        %s507 = scalar_select %p506, %s505, 7
        %s508 = smul.addr %s507, 8
        %s509 = scalar_lea.vmem %s13, %s508
        %s510 = smul.u32 4, %s27
        %v511 = vld [vmem:[%s1] sm:$0xf]
        %v512 = vld [vmem:[%s1 + $0x4] sm:$0xf]
        %v513 = vld [vmem:[%s1 + $0x8] sm:$0xf]
        %v514 = vld [vmem:[%s1 + $0xc] sm:$0xf]
        %v515 = vld [vmem:[%s1 + $0x10] sm:$0xf]
        %v516 = vld [vmem:[%s1 + $0x14] sm:$0xf]
        %v517 = vld [vmem:[%s1 + $0x18] sm:$0xf]
        %v518 = vld [vmem:[%s1 + $0x1c] sm:$0xf]
        %v519 = vld [vmem:[%s1 + $0x20] sm:$0xf]
        %v520 = vld [vmem:[%s1 + $0x24] sm:$0xf]
        %v521 = vld [vmem:[%s1 + $0x28] sm:$0xf]
        %v522 = vld [vmem:[%s1 + $0x2c] sm:$0xf]
        %v523 = vld [vmem:[%s1 + $0x30] sm:$0xf]
        %v524 = vld [vmem:[%s1 + $0x34] sm:$0xf]
        %v525 = vld [vmem:[%s1 + $0x38] sm:$0xf]
        %v526 = vld [vmem:[%s1 + $0x3c] sm:$0xf]
        %v527 = vld [vmem:[%s3] sm:$0xf]
        %v528 = vld [vmem:[%s3 + $0x4] sm:$0xf]
        %v529 = vld [vmem:[%s3 + $0x8] sm:$0xf]
        %v530 = vld [vmem:[%s3 + $0xc] sm:$0xf]
        %v531 = vld [vmem:[%s3 + $0x10] sm:$0xf]
        %v532 = vld [vmem:[%s3 + $0x14] sm:$0xf]
        %v533 = vld [vmem:[%s3 + $0x18] sm:$0xf]
        %v534 = vld [vmem:[%s3 + $0x1c] sm:$0xf]
        %v535 = vld [vmem:[%s3 + $0x20] sm:$0xf]
        %v536 = vld [vmem:[%s3 + $0x24] sm:$0xf]
        %v537 = vld [vmem:[%s3 + $0x28] sm:$0xf]
        %v538 = vld [vmem:[%s3 + $0x2c] sm:$0xf]
        %v539 = vld [vmem:[%s3 + $0x30] sm:$0xf]
        %v540 = vld [vmem:[%s3 + $0x34] sm:$0xf]
        %v541 = vld [vmem:[%s3 + $0x38] sm:$0xf]
        %v542 = vld [vmem:[%s3 + $0x3c] sm:$0xf]
        %v543 = vld [vmem:[#allocation2] sm:$0xf]
        %v544 = vld [vmem:[#allocation2 + $0x4] sm:$0xf]
        %v545 = vld [vmem:[#allocation2 + $0x8] sm:$0xf]
        %v546 = vld [vmem:[#allocation2 + $0xc] sm:$0xf]
        %v547 = vld [vmem:[#allocation2 + $0x10] sm:$0xf]
        %v548 = vld [vmem:[#allocation2 + $0x14] sm:$0xf]
        %v549 = vld [vmem:[#allocation2 + $0x18] sm:$0xf]
        %v550 = vld [vmem:[#allocation2 + $0x1c] sm:$0xf]
        %v551 = vld [vmem:[#allocation2 + $0x20] sm:$0xf]
        %v552 = vld [vmem:[#allocation2 + $0x24] sm:$0xf]
        %v553 = vld [vmem:[#allocation2 + $0x28] sm:$0xf]
        %v554 = vld [vmem:[#allocation2 + $0x2c] sm:$0xf]
        %v555 = vld [vmem:[#allocation2 + $0x30] sm:$0xf]
        %v556 = vld [vmem:[#allocation2 + $0x34] sm:$0xf]
        %v557 = vld [vmem:[#allocation2 + $0x38] sm:$0xf]
        %v558 = vld [vmem:[#allocation2 + $0x3c] sm:$0xf]
        %v559 = vld [vmem:[#allocation4] sm:$0xf]
        %v560 = vld [vmem:[#allocation4 + $0x4] sm:$0xf]
        %v561 = vld [vmem:[#allocation4 + $0x8] sm:$0xf]
        %v562 = vld [vmem:[#allocation4 + $0xc] sm:$0xf]
        %v563 = vld [vmem:[#allocation4 + $0x10] sm:$0xf]
        %v564 = vld [vmem:[#allocation4 + $0x14] sm:$0xf]
        %v565 = vld [vmem:[#allocation4 + $0x18] sm:$0xf]
        %v566 = vld [vmem:[#allocation4 + $0x1c] sm:$0xf]
        %v567 = vld [vmem:[#allocation4 + $0x20] sm:$0xf]
        %v568 = vld [vmem:[#allocation4 + $0x24] sm:$0xf]
        %v569 = vld [vmem:[#allocation4 + $0x28] sm:$0xf]
        %v570 = vld [vmem:[#allocation4 + $0x2c] sm:$0xf]
        %v571 = vld [vmem:[#allocation4 + $0x30] sm:$0xf]
        %v572 = vld [vmem:[#allocation4 + $0x34] sm:$0xf]
        %v573 = vld [vmem:[#allocation4 + $0x38] sm:$0xf]
        %v574 = vld [vmem:[#allocation4 + $0x3c] sm:$0xf]
        %v575 = vld [vmem:[#allocation6] sm:$0xf]
        %v576 = vld [vmem:[#allocation6 + $0x4] sm:$0xf]
        %v577 = vld [vmem:[#allocation6 + $0x8] sm:$0xf]
        %v578 = vld [vmem:[#allocation6 + $0xc] sm:$0xf]
        %v579 = vld [vmem:[#allocation6 + $0x10] sm:$0xf]
        %v580 = vld [vmem:[#allocation6 + $0x14] sm:$0xf]
        %v581 = vld [vmem:[#allocation6 + $0x18] sm:$0xf]
        %v582 = vld [vmem:[#allocation6 + $0x1c] sm:$0xf]
        %v583 = vld [vmem:[#allocation6 + $0x20] sm:$0xf]
        %v584 = vld [vmem:[#allocation6 + $0x24] sm:$0xf]
        %v585 = vld [vmem:[#allocation6 + $0x28] sm:$0xf]
        %v586 = vld [vmem:[#allocation6 + $0x2c] sm:$0xf]
        %v587 = vld [vmem:[#allocation6 + $0x30] sm:$0xf]
        %v588 = vld [vmem:[#allocation6 + $0x34] sm:$0xf]
        %v589 = vld [vmem:[#allocation6 + $0x38] sm:$0xf]
        %v590 = vld [vmem:[#allocation6 + $0x3c] sm:$0xf]
        %v591 = vld [vmem:[#allocation7] sm:$0xf]
        %v592 = vld [vmem:[#allocation7 + $0x4] sm:$0xf]
        %v593 = vld [vmem:[#allocation7 + $0x8] sm:$0xf]
        %v594 = vld [vmem:[#allocation7 + $0xc] sm:$0xf]
        %v595 = vld [vmem:[#allocation7 + $0x10] sm:$0xf]
        %v596 = vld [vmem:[#allocation7 + $0x14] sm:$0xf]
        %v597 = vld [vmem:[#allocation7 + $0x18] sm:$0xf]
        %v598 = vld [vmem:[#allocation7 + $0x1c] sm:$0xf]
        %v599 = vld [vmem:[#allocation7 + $0x20] sm:$0xf]
        %v600 = vld [vmem:[#allocation7 + $0x24] sm:$0xf]
        %v601 = vld [vmem:[#allocation7 + $0x28] sm:$0xf]
        %v602 = vld [vmem:[#allocation7 + $0x2c] sm:$0xf]
        %v603 = vld [vmem:[#allocation7 + $0x30] sm:$0xf]
        %v604 = vld [vmem:[#allocation7 + $0x34] sm:$0xf]
        %v605 = vld [vmem:[#allocation7 + $0x38] sm:$0xf]
        %v606 = vld [vmem:[#allocation7 + $0x3c] sm:$0xf]
        %v607 = vld [vmem:[%s2] sm:$0x1]
        %v608 = vld [vmem:[%s4] sm:$0x1]
        %v609 = vld [vmem:[%s6] sm:$0x1]
        %v610 = vld [vmem:[%s8] sm:$0x1]
        %v611 = vld [vmem:[%s10] sm:$0x1]
        %v612 = vld [vmem:[%s12] sm:$0x1]
        %v613 = vld [vmem:[%s503] sm:$0xf]
        %v614 = vld [vmem:[%s503 + $0x4] sm:$0xf]
        %v615 = vld [vmem:[%s503 + $0x8] sm:$0xf]
        %v616 = vld [vmem:[%s503 + $0xc] sm:$0xf]
        %v618 = vperm.slane %v607, 0
        %v624 = vunpack.c.l.b16 %v613
        %v625 = vunpack.c.l.b16 %v614
        %v626 = vunpack.c.l.b16 %v615
        %v627 = vunpack.c.l.b16 %v616
        %v628 = vpack.c.b16 %v625, %v624
        %v629 = vpack.c.b16 %v627, %v626
        %v648 = vunpack.c.l.b16 %v511
        %v649 = vunpack.c.l.b16 %v512
        %v650 = vunpack.c.l.b16 %v513
        %v651 = vunpack.c.l.b16 %v514
        %v652 = vunpack.c.l.b16 %v515
        %v653 = vunpack.c.l.b16 %v516
        %v654 = vunpack.c.l.b16 %v517
        %v655 = vunpack.c.l.b16 %v518
        %v656 = vunpack.c.l.b16 %v519
        %v657 = vunpack.c.l.b16 %v520
        %v658 = vunpack.c.l.b16 %v521
        %v659 = vunpack.c.l.b16 %v522
        %v660 = vunpack.c.l.b16 %v523
        %v661 = vunpack.c.l.b16 %v524
        %v662 = vunpack.c.l.b16 %v525
        %v663 = vunpack.c.l.b16 %v526
        %v664 = vpack.c.b16 %v649, %v648
        %v665 = vpack.c.b16 %v651, %v650
        %v666 = vpack.c.b16 %v653, %v652
        %v667 = vpack.c.b16 %v655, %v654
        %v668 = vpack.c.b16 %v657, %v656
        %v669 = vpack.c.b16 %v659, %v658
        %v670 = vpack.c.b16 %v661, %v660
        %v671 = vpack.c.b16 %v663, %v662
        %680 = vmatpush.bf16.msra.mxu0 %v671
        %681 = vmatpush.bf16.msra.mxu0 %v670
        %682 = vmatpush.bf16.msra.mxu0 %v669
        %683 = vmatpush.bf16.msra.mxu0 %v668
        %684 = vmatpush.bf16.msra.mxu0 %v667
        %685 = vmatpush.bf16.msra.mxu0 %v666
        %686 = vmatpush.bf16.msra.mxu0 %v665
        %687 = vmatpush.bf16.msra.mxu0 %v664
        %688 = vmatmul.bf16.gmra.mxu0 %v628
        %v689 = vpop.f32.mrf.mxu0
        %v690 = vadd.f32 %v618, %v689
        %v691 = vpop.f32.mrf.mxu0
        %v692 = vadd.f32 %v618, %v691
        %693 = vmatmul.bf16.gmra.mxu0 %v629
        %v694 = vpop.f32.mrf.mxu0
        %v695 = vadd.f32 %v618, %v694
        %v696 = vpop.f32.mrf.mxu0
        %v697 = vadd.f32 %v618, %v696
        %698 = vdwg.mxu0
        %v699 = vmul.f32 %v690, 0.2
        %v700 = vmul.f32 %v692, 0.2
        %v701 = vmul.f32 %v695, 0.2
        %v702 = vmul.f32 %v697, 0.2
        %v703 = vmax.f32 %v690, %v699
        %v704 = vmax.f32 %v692, %v700
        %v705 = vmax.f32 %v695, %v701
        %v706 = vmax.f32 %v697, %v702
        %v707 = vpack.c.bf16 %v704, %v703
        %v708 = vpack.c.bf16 %v706, %v705
        %v710 = vperm.slane %v608, 0
        %v728 = vunpack.c.l.b16 %v527
        %v729 = vunpack.c.l.b16 %v528
        %v730 = vunpack.c.l.b16 %v529
        %v731 = vunpack.c.l.b16 %v530
        %v732 = vunpack.c.l.b16 %v531
        %v733 = vunpack.c.l.b16 %v532
        %v734 = vunpack.c.l.b16 %v533
        %v735 = vunpack.c.l.b16 %v534
        %v736 = vunpack.c.l.b16 %v535
        %v737 = vunpack.c.l.b16 %v536
        %v738 = vunpack.c.l.b16 %v537
        %v739 = vunpack.c.l.b16 %v538
        %v740 = vunpack.c.l.b16 %v539
        %v741 = vunpack.c.l.b16 %v540
        %v742 = vunpack.c.l.b16 %v541
        %v743 = vunpack.c.l.b16 %v542
        %v744 = vpack.c.b16 %v729, %v728
        %v745 = vpack.c.b16 %v731, %v730
        %v746 = vpack.c.b16 %v733, %v732
        %v747 = vpack.c.b16 %v735, %v734
        %v748 = vpack.c.b16 %v737, %v736
        %v749 = vpack.c.b16 %v739, %v738
        %v750 = vpack.c.b16 %v741, %v740
        %v751 = vpack.c.b16 %v743, %v742
        %760 = vmatpush.bf16.msra.mxu0 %v751
        %761 = vmatpush.bf16.msra.mxu0 %v750
        %762 = vmatpush.bf16.msra.mxu0 %v749
        %763 = vmatpush.bf16.msra.mxu0 %v748
        %764 = vmatpush.bf16.msra.mxu0 %v747
        %765 = vmatpush.bf16.msra.mxu0 %v746
        %766 = vmatpush.bf16.msra.mxu0 %v745
        %767 = vmatpush.bf16.msra.mxu0 %v744
        %768 = vmatmul.bf16.gmra.mxu0 %v707
        %v769 = vpop.f32.mrf.mxu0
        %v770 = vadd.f32 %v710, %v769
        %v771 = vpop.f32.mrf.mxu0
        %v772 = vadd.f32 %v710, %v771
        %773 = vmatmul.bf16.gmra.mxu0 %v708
        %v774 = vpop.f32.mrf.mxu0
        %v775 = vadd.f32 %v710, %v774
        %v776 = vpop.f32.mrf.mxu0
        %v777 = vadd.f32 %v710, %v776
        %778 = vdwg.mxu0
        %v779 = vmul.f32 %v770, 0.2
        %v780 = vmul.f32 %v772, 0.2
        %v781 = vmul.f32 %v775, 0.2
        %v782 = vmul.f32 %v777, 0.2
        %v783 = vmax.f32 %v770, %v779
        %v784 = vmax.f32 %v772, %v780
        %v785 = vmax.f32 %v775, %v781
        %v786 = vmax.f32 %v777, %v782
        %v787 = vpack.c.bf16 %v784, %v783
        %v788 = vpack.c.bf16 %v786, %v785
        %v790 = vperm.slane %v609, 0
        %v808 = vunpack.c.l.b16 %v543
        %v809 = vunpack.c.l.b16 %v544
        %v810 = vunpack.c.l.b16 %v545
        %v811 = vunpack.c.l.b16 %v546
        %v812 = vunpack.c.l.b16 %v547
        %v813 = vunpack.c.l.b16 %v548
        %v814 = vunpack.c.l.b16 %v549
        %v815 = vunpack.c.l.b16 %v550
        %v816 = vunpack.c.l.b16 %v551
        %v817 = vunpack.c.l.b16 %v552
        %v818 = vunpack.c.l.b16 %v553
        %v819 = vunpack.c.l.b16 %v554
        %v820 = vunpack.c.l.b16 %v555
        %v821 = vunpack.c.l.b16 %v556
        %v822 = vunpack.c.l.b16 %v557
        %v823 = vunpack.c.l.b16 %v558
        %v824 = vpack.c.b16 %v809, %v808
        %v825 = vpack.c.b16 %v811, %v810
        %v826 = vpack.c.b16 %v813, %v812
        %v827 = vpack.c.b16 %v815, %v814
        %v828 = vpack.c.b16 %v817, %v816
        %v829 = vpack.c.b16 %v819, %v818
        %v830 = vpack.c.b16 %v821, %v820
        %v831 = vpack.c.b16 %v823, %v822
        %840 = vmatpush.bf16.msra.mxu0 %v831
        %841 = vmatpush.bf16.msra.mxu0 %v830
        %842 = vmatpush.bf16.msra.mxu0 %v829
        %843 = vmatpush.bf16.msra.mxu0 %v828
        %844 = vmatpush.bf16.msra.mxu0 %v827
        %845 = vmatpush.bf16.msra.mxu0 %v826
        %846 = vmatpush.bf16.msra.mxu0 %v825
        %847 = vmatpush.bf16.msra.mxu0 %v824
        %848 = vmatmul.bf16.gmra.mxu0 %v787
        %v849 = vpop.f32.mrf.mxu0
        %v850 = vadd.f32 %v790, %v849
        %v851 = vpop.f32.mrf.mxu0
        %v852 = vadd.f32 %v790, %v851
        %853 = vmatmul.bf16.gmra.mxu0 %v788
        %v854 = vpop.f32.mrf.mxu0
        %v855 = vadd.f32 %v790, %v854
        %v856 = vpop.f32.mrf.mxu0
        %v857 = vadd.f32 %v790, %v856
        %858 = vdwg.mxu0
        %v859 = vmul.f32 %v850, 0.2
        %v860 = vmul.f32 %v852, 0.2
        %v861 = vmul.f32 %v855, 0.2
        %v862 = vmul.f32 %v857, 0.2
        %v863 = vmax.f32 %v850, %v859
        %v864 = vmax.f32 %v852, %v860
        %v865 = vmax.f32 %v855, %v861
        %v866 = vmax.f32 %v857, %v862
        %v867 = vpack.c.bf16 %v864, %v863
        %v868 = vpack.c.bf16 %v866, %v865
        %v870 = vperm.slane %v610, 0
        %v888 = vunpack.c.l.b16 %v559
        %v889 = vunpack.c.l.b16 %v560
        %v890 = vunpack.c.l.b16 %v561
        %v891 = vunpack.c.l.b16 %v562
        %v892 = vunpack.c.l.b16 %v563
        %v893 = vunpack.c.l.b16 %v564
        %v894 = vunpack.c.l.b16 %v565
        %v895 = vunpack.c.l.b16 %v566
        %v896 = vunpack.c.l.b16 %v567
        %v897 = vunpack.c.l.b16 %v568
        %v898 = vunpack.c.l.b16 %v569
        %v899 = vunpack.c.l.b16 %v570
        %v900 = vunpack.c.l.b16 %v571
        %v901 = vunpack.c.l.b16 %v572
        %v902 = vunpack.c.l.b16 %v573
        %v903 = vunpack.c.l.b16 %v574
        %v904 = vpack.c.b16 %v889, %v888
        %v905 = vpack.c.b16 %v891, %v890
        %v906 = vpack.c.b16 %v893, %v892
        %v907 = vpack.c.b16 %v895, %v894
        %v908 = vpack.c.b16 %v897, %v896
        %v909 = vpack.c.b16 %v899, %v898
        %v910 = vpack.c.b16 %v901, %v900
        %v911 = vpack.c.b16 %v903, %v902
        %920 = vmatpush.bf16.msra.mxu0 %v911
        %921 = vmatpush.bf16.msra.mxu0 %v910
        %922 = vmatpush.bf16.msra.mxu0 %v909
        %923 = vmatpush.bf16.msra.mxu0 %v908
        %924 = vmatpush.bf16.msra.mxu0 %v907
        %925 = vmatpush.bf16.msra.mxu0 %v906
        %926 = vmatpush.bf16.msra.mxu0 %v905
        %927 = vmatpush.bf16.msra.mxu0 %v904
        %928 = vmatmul.bf16.gmra.mxu0 %v867
        %v929 = vpop.f32.mrf.mxu0
        %v930 = vadd.f32 %v870, %v929
        %v931 = vpop.f32.mrf.mxu0
        %v932 = vadd.f32 %v870, %v931
        %933 = vmatmul.bf16.gmra.mxu0 %v868
        %v934 = vpop.f32.mrf.mxu0
        %v935 = vadd.f32 %v870, %v934
        %v936 = vpop.f32.mrf.mxu0
        %v937 = vadd.f32 %v870, %v936
        %938 = vdwg.mxu0
        %v939 = vmul.f32 %v930, 0.2
        %v940 = vmul.f32 %v932, 0.2
        %v941 = vmul.f32 %v935, 0.2
        %v942 = vmul.f32 %v937, 0.2
        %v943 = vmax.f32 %v930, %v939
        %v944 = vmax.f32 %v932, %v940
        %v945 = vmax.f32 %v935, %v941
        %v946 = vmax.f32 %v937, %v942
        %v947 = vpack.c.bf16 %v944, %v943
        %v948 = vpack.c.bf16 %v946, %v945
        %v950 = vperm.slane %v611, 0
        %v968 = vunpack.c.l.b16 %v575
        %v969 = vunpack.c.l.b16 %v576
        %v970 = vunpack.c.l.b16 %v577
        %v971 = vunpack.c.l.b16 %v578
        %v972 = vunpack.c.l.b16 %v579
        %v973 = vunpack.c.l.b16 %v580
        %v974 = vunpack.c.l.b16 %v581
        %v975 = vunpack.c.l.b16 %v582
        %v976 = vunpack.c.l.b16 %v583
        %v977 = vunpack.c.l.b16 %v584
        %v978 = vunpack.c.l.b16 %v585
        %v979 = vunpack.c.l.b16 %v586
        %v980 = vunpack.c.l.b16 %v587
        %v981 = vunpack.c.l.b16 %v588
        %v982 = vunpack.c.l.b16 %v589
        %v983 = vunpack.c.l.b16 %v590
        %v984 = vpack.c.b16 %v969, %v968
        %v985 = vpack.c.b16 %v971, %v970
        %v986 = vpack.c.b16 %v973, %v972
        %v987 = vpack.c.b16 %v975, %v974
        %v988 = vpack.c.b16 %v977, %v976
        %v989 = vpack.c.b16 %v979, %v978
        %v990 = vpack.c.b16 %v981, %v980
        %v991 = vpack.c.b16 %v983, %v982
        %1000 = vmatpush.bf16.msra.mxu0 %v991
        %1001 = vmatpush.bf16.msra.mxu0 %v990
        %1002 = vmatpush.bf16.msra.mxu0 %v989
        %1003 = vmatpush.bf16.msra.mxu0 %v988
        %1004 = vmatpush.bf16.msra.mxu0 %v987
        %1005 = vmatpush.bf16.msra.mxu0 %v986
        %1006 = vmatpush.bf16.msra.mxu0 %v985
        %1007 = vmatpush.bf16.msra.mxu0 %v984
        %1008 = vmatmul.bf16.gmra.mxu0 %v947
        %v1009 = vpop.f32.mrf.mxu0
        %v1010 = vadd.f32 %v950, %v1009
        %v1011 = vpop.f32.mrf.mxu0
        %v1012 = vadd.f32 %v950, %v1011
        %1013 = vmatmul.bf16.gmra.mxu0 %v948
        %v1014 = vpop.f32.mrf.mxu0
        %v1015 = vadd.f32 %v950, %v1014
        %v1016 = vpop.f32.mrf.mxu0
        %v1017 = vadd.f32 %v950, %v1016
        %1018 = vdwg.mxu0
        %v1019 = vmul.f32 %v1010, 0.2
        %v1020 = vmul.f32 %v1012, 0.2
        %v1021 = vmul.f32 %v1015, 0.2
        %v1022 = vmul.f32 %v1017, 0.2
        %v1023 = vmax.f32 %v1010, %v1019
        %v1024 = vmax.f32 %v1012, %v1020
        %v1025 = vmax.f32 %v1015, %v1021
        %v1026 = vmax.f32 %v1017, %v1022
        %v1027 = vpack.c.bf16 %v1024, %v1023
        %v1028 = vpack.c.bf16 %v1026, %v1025
        %v1030 = vperm.slane %v612, 0
        %v1048 = vunpack.c.l.b16 %v591
        %v1049 = vunpack.c.l.b16 %v592
        %v1050 = vunpack.c.l.b16 %v593
        %v1051 = vunpack.c.l.b16 %v594
        %v1052 = vunpack.c.l.b16 %v595
        %v1053 = vunpack.c.l.b16 %v596
        %v1054 = vunpack.c.l.b16 %v597
        %v1055 = vunpack.c.l.b16 %v598
        %v1056 = vunpack.c.l.b16 %v599
        %v1057 = vunpack.c.l.b16 %v600
        %v1058 = vunpack.c.l.b16 %v601
        %v1059 = vunpack.c.l.b16 %v602
        %v1060 = vunpack.c.l.b16 %v603
        %v1061 = vunpack.c.l.b16 %v604
        %v1062 = vunpack.c.l.b16 %v605
        %v1063 = vunpack.c.l.b16 %v606
        %v1064 = vpack.c.b16 %v1049, %v1048
        %v1065 = vpack.c.b16 %v1051, %v1050
        %v1066 = vpack.c.b16 %v1053, %v1052
        %v1067 = vpack.c.b16 %v1055, %v1054
        %v1068 = vpack.c.b16 %v1057, %v1056
        %v1069 = vpack.c.b16 %v1059, %v1058
        %v1070 = vpack.c.b16 %v1061, %v1060
        %v1071 = vpack.c.b16 %v1063, %v1062
        %1080 = vmatpush.bf16.msra.mxu0 %v1071
        %1081 = vmatpush.bf16.msra.mxu0 %v1070
        %1082 = vmatpush.bf16.msra.mxu0 %v1069
        %1083 = vmatpush.bf16.msra.mxu0 %v1068
        %1084 = vmatpush.bf16.msra.mxu0 %v1067
        %1085 = vmatpush.bf16.msra.mxu0 %v1066
        %1086 = vmatpush.bf16.msra.mxu0 %v1065
        %1087 = vmatpush.bf16.msra.mxu0 %v1064
        %1088 = vmatmul.bf16.gmra.mxu0 %v1027
        %v1089 = vpop.f32.mrf.mxu0
        %v1090 = vadd.f32 %v1030, %v1089
        %v1091 = vpop.f32.mrf.mxu0
        %v1092 = vadd.f32 %v1030, %v1091
        %1093 = vmatmul.bf16.gmra.mxu0 %v1028
        %v1094 = vpop.f32.mrf.mxu0
        %v1095 = vadd.f32 %v1030, %v1094
        %v1096 = vpop.f32.mrf.mxu0
        %v1097 = vadd.f32 %v1030, %v1096
        %1098 = vdwg.mxu0
        %1099 = vst [vmem:[%s509] sm:$0xff] %v1090
        %1100 = vst [vmem:[%s509 + $0x8] sm:$0xff] %v1092
        %1101 = vst [vmem:[%s509 + $0x10] sm:$0xff] %v1095
        %1102 = vst [vmem:[%s509 + $0x18] sm:$0xff] %v1097
        %s1103 = smul.u32 4, %s27
        %p1104 = scmp.lt.s32.totalorder %s1103, 7
        %s1105 = scalar_select %p1104, %s1103, 7
        %s1106 = smul.addr %s1105, 8
        %s1107 = scalar_lea.vmem %s13, %s1106
        // Predicated region
        $region89: #{_latent_generator_forward_impl.1} parent=71 // pred_check
          %p1108 = pneg %p323
        $region90: #{_latent_generator_forward_impl.1} parent=71 // pred_check_branch
          %1110 = sbr.rel (%p1108) target = $region92
        $region91: #{_latent_generator_forward_impl.1} parent=71 // pred_region
          %s1111 = smul.u32 4, %s27
        $region92: #{_latent_generator_forward_impl.1} parent=71 // pred_fallthru
          _
      $region72: #{_latent_generator_forward_impl.1} parent=5 // pred_fallthru
        _
      %p1112 = scmp.le.s32.totalorder 2, %s22
      // Predicated region
      $region93: #{_latent_generator_forward_impl.1} parent=5 // pred_check
        %p1113 = pneg %p1112
      $region94: #{_latent_generator_forward_impl.1} parent=5 // pred_check_branch
        %1115 = sbr.rel (%p1113) target = $region96
      $region95: #{_latent_generator_forward_impl.1} parent=5 // pred_region
        %s1116 = ssub.s32 %s22, 2
        // Predicated region
        $region97: #{_latent_generator_forward_impl.1} parent=95 // pred_check
          %p1117 = pneg %p329
        $region98: #{_latent_generator_forward_impl.1} parent=95 // pred_check_branch
          %1119 = sbr.rel (%p1117) target = $region100
        $region99: #{_latent_generator_forward_impl.1} parent=95 // pred_region
          %s1120 = smul.u32 4, %s28
          %p1121 = scmp.lt.s32.totalorder %s1120, 7
          %s1122 = scalar_select %p1121, %s1120, 7
          %s1123 = smul.addr %s1122, 8
          %s1124 = scalar_lea.vmem %s13, %s1123
        $region100: #{_latent_generator_forward_impl.1} parent=95 // pred_fallthru
          _
      $region96: #{_latent_generator_forward_impl.1} parent=5 // pred_fallthru
        _
    $region6: #{_latent_generator_forward_impl.1} parent=1 // loop_footer
      %s26 = sadd.s32 1, %s22
    $region7: #{_latent_generator_forward_impl.1} parent=1 // loop_footer_branch
      %21 = sbr.rel target = $region3
    $region8: #{_latent_generator_forward_impl.1} parent=1 // loop_exit
      _
    %1125 = vsyncpa [#allocation3], 1
    %s1126 = scalar_lea.sflag [#allocation3], 1
    %1127 = vsyncpa %s1126, 1
    %1128 = vsyncpa [#allocation5], 1
    %1129 = vsyncpa [#allocation8], 1

</llo_original>
